<compile_context>
chip_gen: v6e
topology: v6e:2x2x1
jax: 0.10.0
libtpu: 0.0.40
codegen_flags: <defaults>
</compile_context>

<pallas_src>
import functools

import jax
import jax.numpy as jnp
from jax.experimental import pallas as pl
from jax.experimental.pallas import tpu as pltpu


def _round_up(n, m):
    return ((n + m - 1) // m) * m


def _emd_kernel(x_ref, y_ref, tt_ref, o_ref):
    # d = x - y on the VPU, then one MXU matmul with the resident triangular
    # matrix: cdf_d == cumsum(x - y, axis=1) == cumsum(x) - cumsum(y).
    d = x_ref[...].astype(jnp.float32) - y_ref[...].astype(jnp.float32)
    cdf_d = jnp.dot(d, tt_ref[...], preferred_element_type=jnp.float32)
    o_ref[...] = jnp.sum(cdf_d * cdf_d, axis=1, keepdims=True)


def _pick_block_rows(batch, bins, budget_bytes):
    # Inputs occupy: 2 arrays x 2 pipeline buffers x TB x lane-padded-bins x 4B.
    lane_bins = max(_round_up(bins, 128), 128)
    per_row_bytes = 2 * 2 * lane_bins * 4
    tb = budget_bytes // per_row_bytes
    tb = max(8, min(tb, 2048, _round_up(batch, 8)))
    return (tb // 8) * 8


@functools.partial(jax.jit, static_argnames=("block_rows",))
def earth_movers_distance_loss(x, y, *, block_rows=None):
    """x, y: (B, bins) arrays. Returns (B,) float32, matching the torch module."""
    assert x.shape == y.shape and x.ndim == 2
    B, bins = x.shape

    # Row tile: multiple of 8 (sublane), sized so 2 inputs x 2 buffers fit in
    # a ~12 MiB VMEM budget (tt + output are small on top of that).
    if block_rows is None:
        TB = _pick_block_rows(B, bins, 12 << 20)
    else:
        TB = max(8, (min(block_rows, _round_up(B, 8)) // 8) * 8)
    Bp = _round_up(B, TB)
    if Bp != B:
        pad = ((0, Bp - B), (0, 0))
        x = jnp.pad(x, pad)
        y = jnp.pad(y, pad)

    # Upper-triangular (incl. diagonal) cumsum matrix, built once and kept
    # VMEM-resident via a constant-index BlockSpec.
    row = jnp.arange(bins, dtype=jnp.int32)[:, None]
    col = jnp.arange(bins, dtype=jnp.int32)[None, :]
    tt = (col >= row).astype(jnp.float32)

    grid = (Bp // TB,)
    out = pl.pallas_call(
        _emd_kernel,
        out_shape=jax.ShapeDtypeStruct((Bp, 1), jnp.float32),
        grid_spec=pltpu.PrefetchScalarGridSpec(
            num_scalar_prefetch=0,
            grid=grid,
            in_specs=[
                pl.BlockSpec((TB, bins), lambda i: (i, 0)),
                pl.BlockSpec((TB, bins), lambda i: (i, 0)),
                pl.BlockSpec((bins, bins), lambda i: (0, 0)),  # resident tt
            ],
            out_specs=pl.BlockSpec((TB, 1), lambda i: (i, 0)),
        ),
        compiler_params=pltpu.CompilerParams(
            dimension_semantics=("parallel",),
            vmem_limit_bytes=32 * 1024 * 1024,
        ),
    )(x, y, tt)
    return out[:B, 0]


def _reference(x, y):
    # Pure-JAX reference of the torch forward.
    cdf_x = jnp.cumsum(x.astype(jnp.float32), axis=1)
    cdf_y = jnp.cumsum(y.astype(jnp.float32), axis=1)
    return jnp.sum(jnp.square(cdf_x - cdf_y), axis=1)


if __name__ == "__main__":
    key = jax.random.PRNGKey(0)

    # Case 1: small, exact-fit shapes (batch=4, bins=16), softmax-normalized
    # histograms as the module intends.
    k1, k2, k3, k4 = jax.random.split(key, 4)
    B, bins = 4, 16
    x = jax.nn.softmax(jax.random.normal(k1, (B, bins), dtype=jnp.float32), axis=1)
    y = jax.nn.softmax(jax.random.normal(k2, (B, bins), dtype=jnp.float32), axis=1)
    out = earth_movers_distance_loss(x, y)
    jax.block_until_ready(out)
    assert out.shape == (B,)
    assert jnp.allclose(out, _reference(x, y), atol=1e-5, rtol=1e-5)

    # Case 2: odd batch / odd bins to exercise padding and the tile clamp.
    B2, bins2 = 21, 24
    x2 = jax.nn.softmax(jax.random.normal(k3, (B2, bins2), dtype=jnp.float32), axis=1)
    y2 = jax.nn.softmax(jax.random.normal(k4, (B2, bins2), dtype=jnp.float32), axis=1)
    out2 = earth_movers_distance_loss(x2, y2)
    jax.block_until_ready(out2)
    assert out2.shape == (B2,)
    assert jnp.allclose(out2, _reference(x2, y2), atol=1e-5, rtol=1e-5)

    print("KERNEL_OK")
</pallas_src>

<mosaic_0001>
module attributes {stable_mosaic.version = 11 : i64} {
  func.func @_emd_kernel(%arg0: i32, %arg1: memref<8x16xf32, #tpu.memory_space<vmem>>, %arg2: memref<8x16xf32, #tpu.memory_space<vmem>>, %arg3: memref<16x16xf32, #tpu.memory_space<vmem>>, %arg4: memref<8x1xf32, #tpu.memory_space<vmem>>) attributes {dimension_semantics = [#tpu.dimension_semantics<parallel>], iteration_bounds = array<i64: 1>, scalar_prefetch = 0 : i64, scratch_operands = 0 : i64, tpu.core_type = #tpu.core_type<tc>, window_params = [{transform_indices = @transform_0, window_bounds = array<i64: 8, 16>}, {transform_indices = @transform_1, window_bounds = array<i64: 8, 16>}, {pipeline_mode = #tpu.pipeline_mode<synchronous>, transform_indices = @transform_2, window_bounds = array<i64: 16, 16>}, {transform_indices = @transform_3, window_bounds = array<i64: 8, 1>}]} {
    %c0 = arith.constant 0 : index
    %c0_0 = arith.constant 0 : index
    %0 = vector.load %arg1[%c0, %c0_0] : memref<8x16xf32, #tpu.memory_space<vmem>>, vector<8x16xf32>
    %c0_1 = arith.constant 0 : index
    %c0_2 = arith.constant 0 : index
    %1 = vector.load %arg2[%c0_1, %c0_2] : memref<8x16xf32, #tpu.memory_space<vmem>>, vector<8x16xf32>
    %2 = arith.subf %0, %1 : vector<8x16xf32>
    %c0_3 = arith.constant 0 : index
    %c0_4 = arith.constant 0 : index
    %3 = vector.load %arg3[%c0_3, %c0_4] : memref<16x16xf32, #tpu.memory_space<vmem>>, vector<16x16xf32>
    %cst = arith.constant dense<0.000000e+00> : vector<8x16xf32>
    %4 = tpu.matmul %2, %3, %cst {dimension_numbers = #tpu.dot_dimension_numbers<[1], [0], [0], [1], [0, 0, 1, 1], [], []>} : vector<8x16xf32>, vector<16x16xf32>, vector<8x16xf32> -> vector<8x16xf32>
    %5 = arith.mulf %4, %4 : vector<8x16xf32>
    %cst_5 = arith.constant dense<0.000000e+00> : vector<8xf32>
    %6 = vector.multi_reduction <add>, %5, %cst_5 [1] : vector<8x16xf32> to vector<8xf32>
    %7 = vector.shape_cast %6 : vector<8xf32> to vector<8x1xf32>
    %c0_6 = arith.constant 0 : index
    %c0_7 = arith.constant 0 : index
    %8 = vector.load %arg4[%c0_6, %c0_7] : memref<8x1xf32, #tpu.memory_space<vmem>>, vector<8x1xf32>
    tpu.vector_store %arg4[%c0_6, %c0_7], %7 {strides = array<i32>} : memref<8x1xf32, #tpu.memory_space<vmem>>, vector<8x1xf32>,
    return
  }
  func.func @transform_0(%arg0: i32) -> (i32, i32) {
    %c0_i32 = arith.constant 0 : i32
    %c0_i32_0 = arith.constant 0 : i32
    return %arg0, %c0_i32 : i32, i32
  }
  func.func @transform_1(%arg0: i32) -> (i32, i32) {
    %c0_i32 = arith.constant 0 : i32
    %c0_i32_0 = arith.constant 0 : i32
    return %arg0, %c0_i32 : i32, i32
  }
  func.func @transform_2(%arg0: i32) -> (i32, i32) {
    %c0_i32 = arith.constant 0 : i32
    %c0_i32_0 = arith.constant 0 : i32
    %c0_i32_1 = arith.constant 0 : i32
    return %c0_i32, %c0_i32_0 : i32, i32
  }
  func.func @transform_3(%arg0: i32) -> (i32, i32) {
    %c0_i32 = arith.constant 0 : i32
    %c0_i32_0 = arith.constant 0 : i32
    return %arg0, %c0_i32 : i32, i32
  }
}

</mosaic_0001>

<llo_original>
// kernel: earth_movers_distance_loss.1
$region0: #{earth_movers_distance_loss.1}
  #allocation0 [shape = 'u32[]', space=smem, size = 0x4, offset = 0x4, fixed_abs, tag = 'smem constant byte address 0x4 - core index']
  #allocation1 [shape = 'u32[144,128]{1,0:T(1,128)}', space=vmem, size = 0x12000, scoped, tag = 'internal scratch']
  %s0 = inlined_call_operand.vmem [shape: f32[8,16], index: 0, kind: input, shape index: {}]
  %s1 = inlined_call_operand.vmem [shape: f32[8,16], index: 1, kind: input, shape index: {}]
  %s2 = inlined_call_operand.vmem [shape: f32[16,16], index: 2, kind: input, shape index: {}]
  %s3 = inlined_call_operand.vmem [shape: f32[8,1], index: 3, kind: output, shape index: {}]
  %s4 = sld [smem:[#allocation0]]
  $region22: #{earth_movers_distance_loss.1} parent=0
    _
  %s6 = ssub.s32 1, %s4
  %s7 = scalar_select 0, %s6, %s4
  // Predicated region
  $region2: #{earth_movers_distance_loss.1} parent=0 // pred_check
    _
  $region3: #{earth_movers_distance_loss.1} parent=0 // pred_check_branch
    %9 = sbr.rel (0) target = $region5
  $region4: #{earth_movers_distance_loss.1} parent=0 // pred_region
    _
  $region5: #{earth_movers_distance_loss.1} parent=0 // pred_fallthru
    _
  // Predicated region
  $region6: #{earth_movers_distance_loss.1} parent=0 // pred_check
    _
  $region7: #{earth_movers_distance_loss.1} parent=0 // pred_check_branch
    %11 = sbr.rel (0) target = $region9
  $region8: #{earth_movers_distance_loss.1} parent=0 // pred_region
    _
  $region9: #{earth_movers_distance_loss.1} parent=0 // pred_fallthru
    _
  // Predicated region
  $region10: #{earth_movers_distance_loss.1} parent=0 // pred_check
    _
  $region11: #{earth_movers_distance_loss.1} parent=0 // pred_check_branch
    %13 = sbr.rel (0) target = $region13
  $region12: #{earth_movers_distance_loss.1} parent=0 // pred_region
    _
  $region13: #{earth_movers_distance_loss.1} parent=0 // pred_fallthru
    _
  %v14 = vld [vmem:[%s0] sm:$0xff]
  %v15 = vld [vmem:[%s1] sm:$0xff]
  %v16 = vsub.f32 %v14, %v15
  %v17 = vld [vmem:[%s2] sm:$0xff]
  %v18 = vld [vmem:[%s2 + $0x8] sm:$0xff]
  %vm19 = vcmask 130048
  %v21 = vsel %vm19, %v16, 0
  %23 = vmatprep.subr.mxu0 0.0
  %24 = vmatpush1.msra.mxu0 0.0
  %25 = vmatprep.subr.mxu0 0.0
  %26 = vmatpush1.msra.mxu0 0.0
  %27 = vmatprep.subr.mxu0 0.0
  %28 = vmatpush1.msra.mxu0 0.0
  %29 = vmatprep.subr.mxu0 0.0
  %30 = vmatpush1.msra.mxu0 0.0
  %31 = vmatprep.subr.mxu0 0.0
  %32 = vmatpush1.msra.mxu0 0.0
  %33 = vmatprep.subr.mxu0 0.0
  %34 = vmatpush1.msra.mxu0 0.0
  %35 = vmatprep.subr.mxu0 0.0
  %36 = vmatpush1.msra.mxu0 0.0
  %37 = vmatprep.subr.mxu0 0.0
  %38 = vmatpush1.msra.mxu0 0.0
  %39 = vmatprep.subr.mxu0 0.0
  %40 = vmatpush1.msra.mxu0 0.0
  %41 = vmatprep.subr.mxu0 0.0
  %42 = vmatpush1.msra.mxu0 0.0
  %43 = vmatprep.subr.mxu0 0.0
  %44 = vmatpush1.msra.mxu0 0.0
  %45 = vmatprep.subr.mxu0 0.0
  %46 = vmatpush1.msra.mxu0 0.0
  %47 = vmatprep.subr.mxu0 0.0
  %48 = vmatpush1.msra.mxu0 0.0
  %49 = vmatprep.subr.mxu0 0.0
  %50 = vmatpush1.msra.mxu0 0.0
  %51 = vmatprep.subr.mxu0 0.0
  %52 = vmatpush1.msra.mxu0 %v18
  %53 = vmatprep.subr.mxu0 0.0
  %54 = vmatpush1.msra.mxu0 %v17
  %55 = vmatprep.subr.mxu0 0.0
  %56 = vmatpush2.msra.mxu0 0.0
  %57 = vmatprep.subr.mxu0 0.0
  %58 = vmatpush2.msra.mxu0 0.0
  %59 = vmatprep.subr.mxu0 0.0
  %60 = vmatpush2.msra.mxu0 0.0
  %61 = vmatprep.subr.mxu0 0.0
  %62 = vmatpush2.msra.mxu0 0.0
  %63 = vmatprep.subr.mxu0 0.0
  %64 = vmatpush2.msra.mxu0 0.0
  %65 = vmatprep.subr.mxu0 0.0
  %66 = vmatpush2.msra.mxu0 0.0
  %67 = vmatprep.subr.mxu0 0.0
  %68 = vmatpush2.msra.mxu0 0.0
  %69 = vmatprep.subr.mxu0 0.0
  %70 = vmatpush2.msra.mxu0 0.0
  %71 = vmatprep.subr.mxu0 0.0
  %72 = vmatpush2.msra.mxu0 0.0
  %73 = vmatprep.subr.mxu0 0.0
  %74 = vmatpush2.msra.mxu0 0.0
  %75 = vmatprep.subr.mxu0 0.0
  %76 = vmatpush2.msra.mxu0 0.0
  %77 = vmatprep.subr.mxu0 0.0
  %78 = vmatpush2.msra.mxu0 0.0
  %79 = vmatprep.subr.mxu0 0.0
  %80 = vmatpush2.msra.mxu0 0.0
  %81 = vmatprep.subr.mxu0 0.0
  %82 = vmatpush2.msra.mxu0 0.0
  %83 = vmatprep.subr.mxu0 0.0
  %84 = vmatpush2.msra.mxu0 0.0
  %85 = vmatprep.subr.mxu0 0.0
  %86 = vmatpush2.msra.mxu0 0.0
  %87 = vmatprep.mubr.f32.mxu0 0.0
  %88 = vmatmul.mubr.f32.gmra.mxu0 %v21
  %v89 = vpop.f32.mrf.mxu0
  %v90 = vadd.f32 0.0, %v89
  %v91 = vpop.f32.mrf.mxu0
  %92 = vdwg.mxu0
  %v93 = vmul.f32 %v90, %v90
  %v94 = vsel %vm19, %v93, 0.0
  %95 = vadd.xlane.f32.xlu0 %v94
  %v96 = vpop.xlane.xlu0 %95
  %vm97 = vcmask 7168
  %98 = vst.msk [vmem:[%s3] sm:$0xff] %vm97, %v96
  // Predicated region
  $region14: #{earth_movers_distance_loss.1} parent=0 // pred_check
    _
  $region15: #{earth_movers_distance_loss.1} parent=0 // pred_check_branch
    %100 = sbr.rel (0) target = $region17
  $region16: #{earth_movers_distance_loss.1} parent=0 // pred_region
    _
  $region17: #{earth_movers_distance_loss.1} parent=0 // pred_fallthru
    _
  // Predicated region
  $region18: #{earth_movers_distance_loss.1} parent=0 // pred_check
    _
  $region19: #{earth_movers_distance_loss.1} parent=0 // pred_check_branch
    %102 = sbr.rel (0) target = $region21
  $region20: #{earth_movers_distance_loss.1} parent=0 // pred_region
    _
  $region21: #{earth_movers_distance_loss.1} parent=0 // pred_fallthru
    _

</llo_original>
